<compile_context>
chip_gen: v7x
topology: tpu7x:2x2x1
jax: 0.10.0
libtpu: 0.0.40
codegen_flags: <defaults>
</compile_context>

<pallas_src>
import jax
import jax.numpy as jnp
from jax import lax
from jax.experimental import pallas as pl
from jax.experimental.pallas import tpu as pltpu

POS_WEIGHT = 20.0
_ROW_GROUP = 32          # int8 sublane packing -> keep every row offset/extent 32-aligned
_LANE = 128
_TARGET_X_BLOCK_BYTES = 4 * 1024 * 1024   # ~4 MiB of f32 logits per grid step
_MAX_AUTO_ROWS = 2048                     # cap auto row bump (keeps (R,1) lens block small)


def _round_up(x, m):
    return ((x + m - 1) // m) * m


def _cdiv(a, b):
    return -(-a // b)


def _bce_chunk(x, y):
    # Numerically stable BCE-with-logits with pos_weight p (f32, per element):
    #   loss = (1 - y) * x + (1 + (p - 1) * y) * (log1p(exp(-|x|)) + max(-x, 0))
    w = 1.0 + (POS_WEIGHT - 1.0) * y
    return (1.0 - y) * x + w * (jnp.log1p(jnp.exp(-jnp.abs(x))) + jnp.maximum(-x, 0.0))


def _bce_lengths_kernel(x_ref, y_ref, len_ref, out_ref):
    """x: (R,tT) logits, y: (R,tT) labels, len: (R,1) int32 lengths, out: (32,128) f32 sums."""
    i = pl.program_id(1)
    j = pl.program_id(2)

    @pl.when(jnp.logical_and(i == 0, j == 0))
    def _():
        out_ref[...] = jnp.zeros_like(out_ref)

    rows, t_tile = x_ref.shape
    n_lane = t_tile // _LANE
    n_grp = rows // _ROW_GROUP
    t0 = j * t_tile                                              # element offset along T
    base_col = lax.broadcasted_iota(jnp.int32, (_ROW_GROUP, _LANE), 1)

    def grp_body(g, acc):
        r0 = pl.multiple_of(g * _ROW_GROUP, _ROW_GROUP)
        thr = len_ref[pl.ds(r0, _ROW_GROUP), :] - t0             # (32,1), hoisted out of k-loop
        for k in range(n_lane):                                   # static, whole-vreg chunks
            xk = x_ref[pl.ds(r0, _ROW_GROUP), pl.ds(k * _LANE, _LANE)].astype(jnp.float32)
            yk = y_ref[pl.ds(r0, _ROW_GROUP), pl.ds(k * _LANE, _LANE)].astype(jnp.float32)
            keep = base_col < (thr - k * _LANE)                   # (32,128) bool
            acc = acc + jnp.where(keep, _bce_chunk(xk, yk), 0.0)
        return acc

    acc = lax.fori_loop(0, n_grp, grp_body,
                        jnp.zeros((_ROW_GROUP, _LANE), jnp.float32))
    out_ref[...] += acc


def _bce_mask_kernel(x_ref, y_ref, m_ref, out_ref):
    """Same as above but with an explicit (bf16) mask block (supports fractional masks)."""
    i = pl.program_id(1)
    j = pl.program_id(2)

    @pl.when(jnp.logical_and(i == 0, j == 0))
    def _():
        out_ref[...] = jnp.zeros_like(out_ref)

    rows, t_tile = x_ref.shape
    n_lane = t_tile // _LANE
    n_grp = rows // _ROW_GROUP

    def grp_body(g, acc):
        r0 = pl.multiple_of(g * _ROW_GROUP, _ROW_GROUP)
        for k in range(n_lane):
            xk = x_ref[pl.ds(r0, _ROW_GROUP), pl.ds(k * _LANE, _LANE)].astype(jnp.float32)
            yk = y_ref[pl.ds(r0, _ROW_GROUP), pl.ds(k * _LANE, _LANE)].astype(jnp.float32)
            mk = m_ref[pl.ds(r0, _ROW_GROUP), pl.ds(k * _LANE, _LANE)].astype(jnp.float32)
            acc = acc + _bce_chunk(xk, yk) * mk
        return acc

    acc = lax.fori_loop(0, n_grp, grp_body,
                        jnp.zeros((_ROW_GROUP, _LANE), jnp.float32))
    out_ref[...] += acc


def _pad2d(a, rows, cols):
    r, c = a.shape
    if r == rows and c == cols:
        return a
    return jnp.pad(a, ((0, rows - r), (0, cols - c)))


def _default_nsplit():
    # 2 TensorCores per chip only on v7x; single-TC chips get no benefit from splitting.
    try:
        kind = jax.devices()[0].device_kind.lower()
    except Exception:
        return 1
    return 2 if "v7" in kind else 1


def _tile_geometry(BC, T, row_tile, t_tile, nsplit):
    # ---- time axis: balance tile count so T_pad barely exceeds round_up(T, 128) ----
    T128 = _round_up(T, _LANE)
    nT = _cdiv(T128, max(_LANE, t_tile))
    tT = _round_up(_cdiv(T128, nT), _LANE)
    T_pad = nT * tT

    # ---- row axis: 32-aligned (int8 packing); split across `nsplit` parallel slices ----
    rows_min = _round_up(BC, _ROW_GROUP)
    nsplit = max(1, min(nsplit, rows_min // _ROW_GROUP))     # never create empty splits
    per_split = _round_up(_cdiv(rows_min, nsplit), _ROW_GROUP)

    # aim for ~4 MiB of f32 logits per block (amortize per-step overhead) when tT is narrow
    rows_for_bytes = _round_up(max(1, _TARGET_X_BLOCK_BYTES // (4 * tT)), _ROW_GROUP)
    R_goal = max(row_tile, min(rows_for_bytes, _MAX_AUTO_ROWS))
    R = min(_round_up(R_goal, _ROW_GROUP), per_split)
    rps = _cdiv(per_split, R)
    R = _round_up(_cdiv(per_split, rps), _ROW_GROUP)          # rebalance -> minimal padding
    BC_pad = nsplit * rps * R
    return BC_pad, R, rps, tT, nT, T_pad, nsplit


def masked_bce_loss(inputs, target, lengths=None, mask=None, max_len=None,
                    *, row_tile=512, t_tile=2048, nsplit=None,
                    target_dtype=jnp.int8, mask_dtype=jnp.bfloat16):
    """JAX/Pallas equivalent of MaskedBCELoss.forward.

    inputs, target: (B, C, T); lengths: (B,) ints; mask: broadcastable to target's shape.
    target_dtype=int8 is exact for hard 0/1 labels (pass jnp.float32 for soft labels);
    mask_dtype=bf16 is exact for 0/1 masks. Division by a zero mask sum yields NaN,
    matching the PyTorch module.
    """
    if lengths is None and mask is None:
        raise RuntimeError("Should provide either lengths or mask")

    B, C, T = inputs.shape
    BC = B * C
    if nsplit is None:
        nsplit = _default_nsplit()

    BC_pad, R, rps, tT, nT, T_pad, nsplit = _tile_geometry(BC, T, row_tile, t_tile, nsplit)
    grid = (nsplit, rps, nT)

    x2 = _pad2d(inputs.reshape(BC, T), BC_pad, T_pad)
    y2 = _pad2d(target.reshape(BC, T).astype(target_dtype), BC_pad, T_pad)

    xy_spec = pl.BlockSpec((R, tT), lambda c, i, j: (c * rps + i, j))
    out_spec = pl.BlockSpec((_ROW_GROUP, _LANE), lambda c, i, j: (c, 0))
    out_shape = jax.ShapeDtypeStruct((nsplit * _ROW_GROUP, _LANE), jnp.float32)
    cparams = pltpu.CompilerParams(
        dimension_semantics=("parallel", "arbitrary", "arbitrary"),
        vmem_limit_bytes=32 * 1024 * 1024)

    n_elem = BC_pad * T_pad
    out_bytes = nsplit * _ROW_GROUP * _LANE * 4

    if mask is None:
        lens_i32 = lengths.astype(jnp.int32)
        if max_len is not None:
            lens_i32 = jnp.minimum(lens_i32, jnp.int32(max_len))
        lens_i32 = jnp.minimum(lens_i32, jnp.int32(T))        # never count padded columns
        den = jnp.float32(C) * jnp.sum(lens_i32.astype(jnp.float32))

        row_lengths = jnp.repeat(lens_i32, C)                 # (BC,), matches (b, c) row order
        row_lengths = jnp.pad(row_lengths, (0, BC_pad - BC)).reshape(BC_pad, 1)

        cost = pl.CostEstimate(
            flops=15 * n_elem, transcendentals=2 * n_elem,
            bytes_accessed=int(x2.size * x2.dtype.itemsize
                               + y2.size * y2.dtype.itemsize
                               + row_lengths.size * 4 + out_bytes))

        partial = pl.pallas_call(
            _bce_lengths_kernel,
            out_shape=out_shape,
            grid_spec=pltpu.PrefetchScalarGridSpec(
                num_scalar_prefetch=0,
                grid=grid,
                in_specs=[xy_spec, xy_spec,
                          pl.BlockSpec((R, 1), lambda c, i, j: (c * rps + i, 0))],
                out_specs=out_spec),
            compiler_params=cparams,
            cost_estimate=cost,
        )(x2, y2, row_lengths)
    else:
        # Denominator = sum of the broadcast mask, computed WITHOUT materializing a full
        # (B, C, T) float32 broadcast.
        bcast_factor = target.size // mask.size
        den = jnp.sum(mask.astype(jnp.float32)) * jnp.float32(bcast_factor)
        m2 = _pad2d(jnp.broadcast_to(mask, target.shape).astype(mask_dtype).reshape(BC, T),
                    BC_pad, T_pad)

        cost = pl.CostEstimate(
            flops=15 * n_elem, transcendentals=2 * n_elem,
            bytes_accessed=int(x2.size * x2.dtype.itemsize
                               + y2.size * y2.dtype.itemsize
                               + m2.size * m2.dtype.itemsize + out_bytes))

        partial = pl.pallas_call(
            _bce_mask_kernel,
            out_shape=out_shape,
            grid_spec=pltpu.PrefetchScalarGridSpec(
                num_scalar_prefetch=0,
                grid=grid,
                in_specs=[xy_spec, xy_spec, xy_spec],
                out_specs=out_spec),
            compiler_params=cparams,
            cost_estimate=cost,
        )(x2, y2, m2)

    num = jnp.sum(partial, dtype=jnp.float32)   # tiny (nsplit*32, 128) reduce in XLA
    return num / den


def _sequence_mask(lengths, max_len):
    seq_range = jnp.arange(max_len, dtype=jnp.int32)[None, :]        # (1, T)
    return seq_range < lengths[:, None].astype(jnp.int32)            # (B, T)


def _reference_loss(inputs, target, lengths, max_len=None):
    B, C, T = inputs.shape
    if max_len is None:
        max_len = T
    mask = _sequence_mask(lengths, max_len).astype(jnp.float32)[:, None, :]
    mask_ = jnp.broadcast_to(mask, target.shape)
    x, y = inputs.astype(jnp.float32), target.astype(jnp.float32)
    w = 1.0 + (POS_WEIGHT - 1.0) * y
    losses = (1.0 - y) * x + w * (jnp.log1p(jnp.exp(-jnp.abs(x))) + jnp.maximum(-x, 0.0))
    return (losses * mask_).sum() / mask_.sum()


if __name__ == "__main__":
    key = jax.random.PRNGKey(0)
    k1, k2 = jax.random.split(key)

    B, C, T = 2, 4, 16
    inputs = jax.random.normal(k1, (B, C, T), dtype=jnp.float32)            # logits
    target = (jax.random.uniform(k2, (B, C, T)) > 0.5).astype(jnp.float32)  # 0/1 labels
    lengths = jnp.array([16, 10], dtype=jnp.int32)

    ref = _reference_loss(inputs, target, lengths)

    # lengths path (mask generated in-kernel from per-row lengths)
    out = jax.block_until_ready(masked_bce_loss(inputs, target, lengths=lengths))
    assert jnp.allclose(out, ref, rtol=1e-5, atol=1e-5), (out, ref)

    # explicit-mask path
    mask = _sequence_mask(lengths, T).astype(jnp.float32)[:, None, :]
    out_m = jax.block_until_ready(masked_bce_loss(inputs, target, mask=mask))
    assert jnp.allclose(out_m, ref, rtol=1e-5, atol=1e-5), (out_m, ref)

    print("KERNEL_OK")
</pallas_src>

<mosaic_0001>
module attributes {stable_mosaic.version = 11 : i64} {
  func.func @_bce_lengths_kernel(%arg0: i32, %arg1: i32, %arg2: i32, %arg3: memref<32x128xf32, #tpu.memory_space<vmem>>, %arg4: memref<32x128xi8, #tpu.memory_space<vmem>>, %arg5: memref<32x1xi32, #tpu.memory_space<vmem>>, %arg6: memref<32x128xf32, #tpu.memory_space<vmem>>) attributes {dimension_semantics = [#tpu.dimension_semantics<parallel>, #tpu.dimension_semantics<arbitrary>, #tpu.dimension_semantics<arbitrary>], iteration_bounds = array<i64: 1, 1, 1>, scalar_prefetch = 0 : i64, scratch_operands = 0 : i64, tpu.core_type = #tpu.core_type<tc>, window_params = [{transform_indices = @transform_0, window_bounds = array<i64: 32, 128>}, {transform_indices = @transform_1, window_bounds = array<i64: 32, 128>}, {transform_indices = @transform_2, window_bounds = array<i64: 32, 1>}, {transform_indices = @transform_3, window_bounds = array<i64: 32, 128>}]} {
    %c0_i32 = arith.constant 0 : i32
    %0 = arith.cmpi eq, %arg1, %c0_i32 : i32
    %c0_i32_0 = arith.constant 0 : i32
    %1 = arith.cmpi eq, %arg2, %c0_i32_0 : i32
    %2 = arith.andi %0, %1 : i1
    %3 = arith.extui %2 : i1 to i32
    %c0_i32_1 = arith.constant 0 : i32
    %4 = arith.cmpi ne, %3, %c0_i32_1 : i32
    scf.if %4 {
      %cst_17 = arith.constant 0.000000e+00 : f32
      %48 = vector.broadcast %cst_17 : f32 to vector<32x128xf32>
      %c0_18 = arith.constant 0 : index
      %c0_19 = arith.constant 0 : index
      %49 = vector.load %arg6[%c0_18, %c0_19] : memref<32x128xf32, #tpu.memory_space<vmem>>, vector<32x128xf32>
      tpu.vector_store %arg6[%c0_18, %c0_19], %48 {strides = array<i32>} : memref<32x128xf32, #tpu.memory_space<vmem>>, vector<32x128xf32>,
    } else {
    }
    %c128_i32 = arith.constant 128 : i32
    %5 = arith.muli %arg2, %c128_i32 : i32
    %6 = tpu.iota {dimensions = array<i32: 1>} : vector<32x128xi32>
    %cst = arith.constant 0.000000e+00 : f32
    %7 = vector.broadcast %cst : f32 to vector<32x128xf32>
    %c0_i32_2 = arith.constant 0 : i32
    %c32_i32 = arith.constant 32 : i32
    %8 = arith.muli %c0_i32_2, %c32_i32 : i32
    %9 = tpu.assume_multiple %8, 32 : i32
    %10 = arith.index_cast %9 : i32 to index
    %c0 = arith.constant 0 : index
    %11 = vector.load %arg5[%10, %c0] : memref<32x1xi32, #tpu.memory_space<vmem>>, vector<32x1xi32>
    %12 = vector.broadcast %5 : i32 to vector<32x1xi32>
    %13 = arith.subi %11, %12 : vector<32x1xi32>
    %14 = arith.index_cast %9 : i32 to index
    %c0_3 = arith.constant 0 : index
    %15 = vector.load %arg3[%14, %c0_3] : memref<32x128xf32, #tpu.memory_space<vmem>>, vector<32x128xf32>
    %16 = arith.index_cast %9 : i32 to index
    %c0_4 = arith.constant 0 : index
    %17 = vector.load %arg4[%16, %c0_4] : memref<32x128xi8, #tpu.memory_space<vmem>>, vector<32x128xi8>
    %18 = arith.sitofp %17 : vector<32x128xi8> to vector<32x128xf32>
    %c0_i32_5 = arith.constant 0 : i32
    %19 = vector.broadcast %c0_i32_5 : i32 to vector<32x1xi32>
    %20 = arith.subi %13, %19 : vector<32x1xi32>
    %21 = vector.broadcast %20 : vector<32x1xi32> to vector<32x128xi32>
    %22 = arith.cmpi slt, %6, %21 : vector<32x128xi32>
    %cst_6 = arith.constant 1.900000e+01 : f32
    %23 = vector.broadcast %cst_6 : f32 to vector<32x128xf32>
    %24 = arith.mulf %23, %18 : vector<32x128xf32>
    %cst_7 = arith.constant 1.000000e+00 : f32
    %25 = vector.broadcast %cst_7 : f32 to vector<32x128xf32>
    %26 = arith.addf %25, %24 : vector<32x128xf32>
    %cst_8 = arith.constant 1.000000e+00 : f32
    %27 = vector.broadcast %cst_8 : f32 to vector<32x128xf32>
    %28 = arith.subf %27, %18 : vector<32x128xf32>
    %29 = arith.mulf %28, %15 : vector<32x128xf32>
    %30 = math.absf %15 : vector<32x128xf32>
    %cst_9 = arith.constant 0.000000e+00 : f32
    %31 = vector.broadcast %cst_9 : f32 to vector<32x128xf32>
    %32 = arith.subf %31, %30 : vector<32x128xf32>
    %33 = math.exp %32 : vector<32x128xf32>
    %34 = math.log1p %33 : vector<32x128xf32>
    %cst_10 = arith.constant 0.000000e+00 : f32
    %35 = vector.broadcast %cst_10 : f32 to vector<32x128xf32>
    %36 = arith.subf %35, %15 : vector<32x128xf32>
    %cst_11 = arith.constant 0.000000e+00 : f32
    %37 = vector.broadcast %cst_11 : f32 to vector<32x128xf32>
    %38 = arith.maximumf %36, %37 : vector<32x128xf32>
    %39 = arith.addf %34, %38 : vector<32x128xf32>
    %40 = arith.mulf %26, %39 : vector<32x128xf32>
    %41 = arith.addf %29, %40 : vector<32x128xf32>
    %cst_12 = arith.constant 0.000000e+00 : f32
    %42 = vector.broadcast %cst_12 : f32 to vector<32x128xf32>
    %43 = arith.select %22, %41, %42 : vector<32x128xi1>, vector<32x128xf32>
    %44 = arith.addf %7, %43 : vector<32x128xf32>
    %c1_i32 = arith.constant 1 : i32
    %c0_13 = arith.constant 0 : index
    %c0_14 = arith.constant 0 : index
    %45 = vector.load %arg6[%c0_13, %c0_14] : memref<32x128xf32, #tpu.memory_space<vmem>>, vector<32x128xf32>
    %46 = arith.addf %45, %44 : vector<32x128xf32>
    %c0_15 = arith.constant 0 : index
    %c0_16 = arith.constant 0 : index
    %47 = vector.load %arg6[%c0_15, %c0_16] : memref<32x128xf32, #tpu.memory_space<vmem>>, vector<32x128xf32>
    tpu.vector_store %arg6[%c0_15, %c0_16], %46 {strides = array<i32>} : memref<32x128xf32, #tpu.memory_space<vmem>>, vector<32x128xf32>,
    return
  }
  func.func @transform_0(%arg0: i32, %arg1: i32, %arg2: i32) -> (i32, i32) {
    %c1_i32 = arith.constant 1 : i32
    %0 = arith.muli %arg0, %c1_i32 : i32
    %1 = arith.addi %0, %arg1 : i32
    %c0_i32 = arith.constant 0 : i32
    return %1, %arg2 : i32, i32
  }
  func.func @transform_1(%arg0: i32, %arg1: i32, %arg2: i32) -> (i32, i32) {
    %c1_i32 = arith.constant 1 : i32
    %0 = arith.muli %arg0, %c1_i32 : i32
    %1 = arith.addi %0, %arg1 : i32
    %c0_i32 = arith.constant 0 : i32
    return %1, %arg2 : i32, i32
  }
  func.func @transform_2(%arg0: i32, %arg1: i32, %arg2: i32) -> (i32, i32) {
    %c1_i32 = arith.constant 1 : i32
    %0 = arith.muli %arg0, %c1_i32 : i32
    %1 = arith.addi %0, %arg1 : i32
    %c0_i32 = arith.constant 0 : i32
    %c0_i32_0 = arith.constant 0 : i32
    return %1, %c0_i32 : i32, i32
  }
  func.func @transform_3(%arg0: i32, %arg1: i32, %arg2: i32) -> (i32, i32) {
    %c0_i32 = arith.constant 0 : i32
    %c0_i32_0 = arith.constant 0 : i32
    return %arg0, %c0_i32 : i32, i32
  }
}

</mosaic_0001>

<llo_original>
// kernel: tpu_custom_call.1
$region0: #{tpu_custom_call.1}
  #allocation0 [shape = 'u32[]', space=smem, size = 0x4, offset = 0x4, fixed_abs, tag = 'smem constant byte address 0x4 - core index']
  #allocation1 [shape = 'u32[144,128]{1,0:T(1,128)}', space=vmem, size = 0x12000, scoped, tag = 'internal scratch']
  %s0 = inlined_call_operand.vmem [shape: f32[32,128], index: 0, kind: input, shape index: {}]
  %s1 = inlined_call_operand.hbm [shape: s8[32,128], index: 1, kind: input, shape index: {}]
  %s2 = inlined_call_operand.vmem [shape: s32[32,1], index: 2, kind: input, shape index: {}]
  %s3 = inlined_call_operand.hbm [shape: f32[32,128], index: 3, kind: output, shape index: {}]
  %s4 = sld [smem:[#allocation0]]
  $region30: #{tpu_custom_call.1} parent=0
    _
  %s6 = ssub.s32 1, %s4
  %s7 = scalar_select 0, %s6, %s4
  $region1: #{tpu_custom_call.1} parent=0
    #allocation2 [shape = 'u8[4096]{0}', space=vmem, size = 0x1000, scoped, tag = 'input window, operand 1, single buffered']
    #allocation3 [shape = 's32[1]{0}', space=sflag, size = 0x4, scoped, tag = 'scoped memory for tpu_custom_call.1']
    #allocation4 [shape = 's32[1]{0}', space=sflag, size = 0x4, scoped, tag = 'scoped memory for tpu_custom_call.1']
    #allocation5 [shape = 'u8[16384]{0}', space=vmem, size = 0x4000, scoped, tag = 'output window, operand 0, single buffered']
    %8 = vsyncpa [#allocation3], 0
    %9 = vsyncpa [#allocation4], 0
    // Predicated region
    $region2: #{tpu_custom_call.1} parent=1 // pred_check
      _
    $region3: #{tpu_custom_call.1} parent=1 // pred_check_branch
      %11 = sbr.rel (0) target = $region5
    $region4: #{tpu_custom_call.1} parent=1 // pred_region
      %s12 = sadd.s32 0, 0
      %s13 = smul.u32 4, %s12
      %p14 = scmp.lt.s32.totalorder %s13, 3
      %s15 = scalar_select %p14, %s13, 3
      %s16 = smul.addr %s15, 8
      %s17 = scalar_lea.vmem %s0, %s16
      %s18 = sadd.s32 0, 0
      %s19 = smul.u32 4, %s18
    $region5: #{tpu_custom_call.1} parent=1 // pred_fallthru
      _
    // Predicated region
    $region6: #{tpu_custom_call.1} parent=1 // pred_check
      _
    $region7: #{tpu_custom_call.1} parent=1 // pred_check_branch
      %21 = sbr.rel (0) target = $region9
    $region8: #{tpu_custom_call.1} parent=1 // pred_region
      %s22 = sadd.s32 0, 0
      %s24 = ssub.s32 128, 128
      %25 = vsyncadd [#allocation3], %s24
      %s26 = smul.addr %s22, 128
      %s27 = scalar_lea.hbm %s1, %s26
      %s29 = sshll.u32 [#allocation2], 4
      %s30 = int_to_ptr.vmem [resolvable:$true] %s29
      %32 = dma.hbm_to_vmem [thread:$0]  %s27, 128, %s30, [#allocation3]
    $region9: #{tpu_custom_call.1} parent=1 // pred_fallthru
      _
    // Predicated region
    $region10: #{tpu_custom_call.1} parent=1 // pred_check
      _
    $region11: #{tpu_custom_call.1} parent=1 // pred_check_branch
      %34 = sbr.rel (0) target = $region13
    $region12: #{tpu_custom_call.1} parent=1 // pred_region
      %s35 = sadd.s32 0, 0
      %s36 = smul.u32 4, %s35
      %p37 = scmp.lt.s32.totalorder %s36, 3
      %s38 = scalar_select %p37, %s36, 3
      %s39 = smul.addr %s38, 8
      %s40 = scalar_lea.vmem %s2, %s39
      %s41 = sadd.s32 0, 0
      %s42 = smul.u32 4, %s41
    $region13: #{tpu_custom_call.1} parent=1 // pred_fallthru
      _
    // Predicated region
    $region14: #{tpu_custom_call.1} parent=1 // pred_check
      _
    $region15: #{tpu_custom_call.1} parent=1 // pred_check_branch
      %44 = sbr.rel (0) target = $region17
    $region16: #{tpu_custom_call.1} parent=1 // pred_region
      %45 = dma.done [#allocation3], 128
    $region17: #{tpu_custom_call.1} parent=1 // pred_fallthru
      _
    %s46 = sadd.s32 0, 0
    %s47 = smul.u32 4, %s46
    %p48 = scmp.lt.s32.totalorder %s47, 3
    %s49 = scalar_select %p48, %s47, 3
    %s50 = smul.addr %s49, 8
    %s51 = scalar_lea.vmem %s0, %s50
    %s52 = sadd.s32 0, 0
    %s53 = smul.u32 4, %s52
    %p54 = scmp.lt.s32.totalorder %s53, 3
    %s55 = scalar_select %p54, %s53, 3
    %s56 = smul.addr %s55, 8
    %s57 = scalar_lea.vmem %s2, %s56
    %s58 = sadd.s32 0, 0
    %s59 = smul.u32 4, %s58
    %p60 = scmp.lt.s32.totalorder %s59, 3
    %s61 = scalar_select %p60, %s59, 3
    %s62 = smul.addr %s61, 8
    %s63 = scalar_lea.vmem %s0, %s62
    %s64 = sadd.s32 0, 0
    %s65 = smul.u32 4, %s64
    %s66 = sadd.s32 0, 0
    %s67 = sadd.s32 0, 0
    %s68 = smul.u32 4, %s67
    %p69 = scmp.lt.s32.totalorder %s68, 3
    %s70 = scalar_select %p69, %s68, 3
    %s71 = smul.addr %s70, 8
    %s72 = scalar_lea.vmem %s2, %s71
    %s73 = sadd.s32 0, 0
    %s74 = smul.u32 4, %s73
    %p75 = scmp.eq.s32.totalorder 0, 0
    %p76 = scmp.eq.s32.totalorder 0, 0
    %p77 = pnand %p75, %p76
    %p78 = pneg %p77
    // Predicated region
    $region18: #{tpu_custom_call.1} parent=1 // pred_check
      _
    $region19: #{tpu_custom_call.1} parent=1 // pred_check_branch
      %80 = sbr.rel (%p77) target = $region21
    $region20: #{tpu_custom_call.1} parent=1 // pred_region
      %81 = vst [vmem:[#allocation5] sm:$0xff] 0.0
      %82 = vst [vmem:[#allocation5 + $0x8] sm:$0xff] 0.0
      %83 = vst [vmem:[#allocation5 + $0x10] sm:$0xff] 0.0
      %84 = vst [vmem:[#allocation5 + $0x18] sm:$0xff] 0.0
    $region21: #{tpu_custom_call.1} parent=1 // pred_fallthru
      _
    %s85 = smul.u32 0, 128
    %v86 = vlaneseq
    %v87 = vand.u32 %v86, 127
    %v88 = vld [vmem:[%s72] sm:$0xff]
    %v89 = vld [vmem:[%s72 + $0x8] sm:$0xff]
    %v90 = vld [vmem:[%s72 + $0x10] sm:$0xff]
    %v91 = vld [vmem:[%s72 + $0x18] sm:$0xff]
    %v92 = vstv %s85
    %v93 = vsub.s32 %v88, %v92
    %v94 = vsub.s32 %v89, %v92
    %v95 = vsub.s32 %v90, %v92
    %v96 = vsub.s32 %v91, %v92
    %v97 = vld [vmem:[%s63] sm:$0xff]
    %v98 = vld [vmem:[%s63 + $0x8] sm:$0xff]
    %v99 = vld [vmem:[%s63 + $0x10] sm:$0xff]
    %v100 = vld [vmem:[%s63 + $0x18] sm:$0xff]
    %v101 = vld [vmem:[#allocation2] sm:$0xff]
    %v102 = vunpack.c.0.s8 %v101
    %v103 = vunpack.c.1.s8 %v101
    %v104 = vunpack.c.2.s8 %v101
    %v105 = vunpack.c.3.s8 %v101
    %v106 = vcvt.s32.f32 %v102
    %v107 = vcvt.s32.f32 %v103
    %v108 = vcvt.s32.f32 %v104
    %v109 = vcvt.s32.f32 %v105
    %110 = vset.pattern.permute.xlu0 0
    %111 = vperm.xlu0 %110, %v93
    %v112 = vpop.permute.xlu0 %111
    %113 = vset.pattern.permute.xlu0 0
    %114 = vperm.xlu0 %113, %v94
    %v115 = vpop.permute.xlu0 %114
    %116 = vset.pattern.permute.xlu0 0
    %117 = vperm.xlu0 %116, %v95
    %v118 = vpop.permute.xlu0 %117
    %119 = vset.pattern.permute.xlu0 0
    %120 = vperm.xlu0 %119, %v96
    %v121 = vpop.permute.xlu0 %120
    %vm122 = vcmp.lt.s32.totalorder %v87, %v112
    %vm123 = vcmp.lt.s32.totalorder %v87, %v115
    %vm124 = vcmp.lt.s32.totalorder %v87, %v118
    %vm125 = vcmp.lt.s32.totalorder %v87, %v121
    %v126 = vmul.f32 %v106, 19.0
    %v127 = vmul.f32 %v107, 19.0
    %v128 = vmul.f32 %v108, 19.0
    %v129 = vmul.f32 %v109, 19.0
    %v130 = vadd.f32 %v126, 1.0
    %v131 = vadd.f32 %v127, 1.0
    %v132 = vadd.f32 %v128, 1.0
    %v133 = vadd.f32 %v129, 1.0
    %v134 = vsub.f32 1.0, %v106
    %v135 = vsub.f32 1.0, %v107
    %v136 = vsub.f32 1.0, %v108
    %v137 = vsub.f32 1.0, %v109
    %v138 = vmul.f32 %v134, %v97
    %v139 = vmul.f32 %v135, %v98
    %v140 = vmul.f32 %v136, %v99
    %v141 = vmul.f32 %v137, %v100
    %v142 = vand.u32 2147483647, %v97
    %v143 = vand.u32 2147483647, %v98
    %v144 = vand.u32 2147483647, %v99
    %v145 = vand.u32 2147483647, %v100
    %v146 = vsub.f32 0.0, %v142
    %v147 = vsub.f32 0.0, %v143
    %v148 = vsub.f32 0.0, %v144
    %v149 = vsub.f32 0.0, %v145
    %v150 = vmul.f32 %v146, 1.442695
    %v151 = vpow.pop %v150
    %v152 = vmul.f32 %v147, 1.442695
    %v153 = vpow.pop %v152
    %v154 = vmul.f32 %v148, 1.442695
    %v155 = vpow.pop %v154
    %v156 = vmul.f32 %v149, 1.442695
    %v157 = vpow.pop %v156
    %v158 = vadd.f32 %v151, 1.0
    %v159 = vlog2.pop %v158
    %v160 = vmul.f32 %v159, 0.6931472
    %v161 = vmul.f32 -0.5, %v151
    %v162 = vadd.f32 %v161, 1.0
    %v163 = vmul.f32 %v162, %v151
    %v164 = vand.u32 2147483647, %v151
    %vm165 = vcmp.lt.f32.partialorder %v164, 0.0004427343
    %v166 = vsel %vm165, %v163, %v160
    %v167 = vadd.f32 %v153, 1.0
    %v168 = vlog2.pop %v167
    %v169 = vmul.f32 %v168, 0.6931472
    %v170 = vmul.f32 -0.5, %v153
    %v171 = vadd.f32 %v170, 1.0
    %v172 = vmul.f32 %v171, %v153
    %v173 = vand.u32 2147483647, %v153
    %vm174 = vcmp.lt.f32.partialorder %v173, 0.0004427343
    %v175 = vsel %vm174, %v172, %v169
    %v176 = vadd.f32 %v155, 1.0
    %v177 = vlog2.pop %v176
    %v178 = vmul.f32 %v177, 0.6931472
    %v179 = vmul.f32 -0.5, %v155
    %v180 = vadd.f32 %v179, 1.0
    %v181 = vmul.f32 %v180, %v155
    %v182 = vand.u32 2147483647, %v155
    %vm183 = vcmp.lt.f32.partialorder %v182, 0.0004427343
    %v184 = vsel %vm183, %v181, %v178
    %v185 = vadd.f32 %v157, 1.0
    %v186 = vlog2.pop %v185
    %v187 = vmul.f32 %v186, 0.6931472
    %v188 = vmul.f32 -0.5, %v157
    %v189 = vadd.f32 %v188, 1.0
    %v190 = vmul.f32 %v189, %v157
    %v191 = vand.u32 2147483647, %v157
    %vm192 = vcmp.lt.f32.partialorder %v191, 0.0004427343
    %v193 = vsel %vm192, %v190, %v187
    %v194 = vsub.f32 0.0, %v97
    %v195 = vsub.f32 0.0, %v98
    %v196 = vsub.f32 0.0, %v99
    %v197 = vsub.f32 0.0, %v100
    %v198 = vmax.f32 %v194, 0.0
    %v199 = vmax.f32 %v195, 0.0
    %v200 = vmax.f32 %v196, 0.0
    %v201 = vmax.f32 %v197, 0.0
    %v202 = vadd.f32 %v166, %v198
    %v203 = vadd.f32 %v175, %v199
    %v204 = vadd.f32 %v184, %v200
    %v205 = vadd.f32 %v193, %v201
    %v206 = vmul.f32 %v130, %v202
    %v207 = vmul.f32 %v131, %v203
    %v208 = vmul.f32 %v132, %v204
    %v209 = vmul.f32 %v133, %v205
    %v210 = vadd.f32 %v138, %v206
    %v211 = vadd.f32 %v139, %v207
    %v212 = vadd.f32 %v140, %v208
    %v213 = vadd.f32 %v141, %v209
    %v214 = vsel %vm122, %v210, 0.0
    %v215 = vsel %vm123, %v211, 0.0
    %v216 = vsel %vm124, %v212, 0.0
    %v217 = vsel %vm125, %v213, 0.0
    %v218 = vadd.f32 %v214, 0.0
    %v219 = vadd.f32 %v215, 0.0
    %v220 = vadd.f32 %v216, 0.0
    %v221 = vadd.f32 %v217, 0.0
    %v222 = vld [vmem:[#allocation5] sm:$0xff]
    %v223 = vld [vmem:[#allocation5 + $0x8] sm:$0xff]
    %v224 = vld [vmem:[#allocation5 + $0x10] sm:$0xff]
    %v225 = vld [vmem:[#allocation5 + $0x18] sm:$0xff]
    %v226 = vadd.f32 %v222, %v218
    %v227 = vadd.f32 %v223, %v219
    %v228 = vadd.f32 %v224, %v220
    %v229 = vadd.f32 %v225, %v221
    %230 = vst [vmem:[#allocation5] sm:$0xff] %v226
    %231 = vst [vmem:[#allocation5 + $0x8] sm:$0xff] %v227
    %232 = vst [vmem:[#allocation5 + $0x10] sm:$0xff] %v228
    %233 = vst [vmem:[#allocation5 + $0x18] sm:$0xff] %v229
    // Predicated region
    $region22: #{tpu_custom_call.1} parent=1 // pred_check
      _
    $region23: #{tpu_custom_call.1} parent=1 // pred_check_branch
      %235 = sbr.rel (0) target = $region25
    $region24: #{tpu_custom_call.1} parent=1 // pred_region
      %s237 = ssub.s32 512, 512
      %238 = vsyncadd [#allocation4], %s237
      %s239 = sshll.u32 [#allocation5], 4
      %s240 = int_to_ptr.vmem [resolvable:$true] %s239
      %245 = dma.vmem_to_hbm [thread:$0]  %s240, 512, %s3, [#allocation4], 128, 128, 8
    $region25: #{tpu_custom_call.1} parent=1 // pred_fallthru
      _
    // Predicated region
    $region26: #{tpu_custom_call.1} parent=1 // pred_check
      _
    $region27: #{tpu_custom_call.1} parent=1 // pred_check_branch
      %247 = sbr.rel (0) target = $region29
    $region28: #{tpu_custom_call.1} parent=1 // pred_region
      %248 = dma.done [#allocation4], 512
    $region29: #{tpu_custom_call.1} parent=1 // pred_fallthru
      _
    %249 = vsyncpa [#allocation3], 1
    %250 = vsyncpa [#allocation4], 1

</llo_original>
